<compile_context>
chip_gen: v6e
topology: v6e:2x2x1
jax: 0.10.0
libtpu: 0.0.40
codegen_flags: <defaults>
</compile_context>

<pallas_src>
import numpy as np

import jax
import jax.numpy as jnp
from jax.experimental import pallas as pl
from jax.experimental.pallas import tpu as pltpu

HIDDEN = 16            # AmplitudeAwareNonlin(hidden_size=16, num_layers=2)
LANE = 128
TARGET_TILE_ROWS = 1024  # 512 KiB per f32 tile; 2 MiB total double-buffered


def _round_up(a, b):
    return (a + b - 1) // b * b


def _pair_sum_matrix():
    """(128,128) f32 0/1 matrix P with P[a,j] = 1 iff a//2 == j//2.

    For a lane-interleaved (re, im, re, im, ...) row, amp = sq @ P gives every
    lane j the pair sum sq[2*(j//2)] + sq[2*(j//2)+1] = |x|^2 of its complex
    element.  Runs on the MXU, which is otherwise idle in this kernel.
    """
    idx = np.arange(LANE)
    return jnp.asarray((idx[:, None] // 2) == (idx[None, :] // 2), jnp.float32)


def _nlin_kernel(w1h_ref, b1h_ref, w2_ref, aff_ref, pair_ref, x_ref, o_ref):
    """Amplitude-aware scaling on an interleaved (re/im) lane-dense tile.

    w1h,b1h : SMEM (HIDDEN,) -- halved first-layer params (g_k = amp*w1h+b1h = h_k/2)
    w2      : SMEM (HIDDEN,) -- second-layer weights
    aff     : SMEM (2,)      -- [sum_k w2*w1h, b2 + sum_k w2*b1h]  (folded linear part)
    pair    : VMEM (128,128) -- constant pair-sum matrix
    x       : VMEM (T,128)   -- interleaved real/imag floats
    """
    x = x_ref[...]
    sq = x * x
    amp = jnp.dot(sq, pair_ref[...], preferred_element_type=jnp.float32)

    # Hoist all SMEM scalar reads out of the unrolled hidden loop.
    w1h = [w1h_ref[k] for k in range(HIDDEN)]
    b1h = [b1h_ref[k] for k in range(HIDDEN)]
    w2 = [w2_ref[k] for k in range(HIDDEN)]
    lin_w = aff_ref[0]
    lin_b = aff_ref[1]

    # SiLU(h) = h*sigmoid(h) = g*(1+tanh(g)),  g = h/2.
    # scaling = b2 + sum_k w2[k]*g_k*(1+t_k)
    #         = amp*lin_w + lin_b + sum_k (w2[k]*g_k)*tanh(g_k)
    acc = jnp.zeros_like(amp)
    for k in range(HIDDEN):
        g = amp * w1h[k] + b1h[k]
        acc = acc + (w2[k] * g) * jnp.tanh(g)
    scaling = amp * lin_w + lin_b + acc

    o_ref[...] = x * scaling


@jax.jit
def learnable_nlin_core(x, params):
    """x: [..., 2] float32 (last axis = real/imag). Returns same shape."""
    w1, b1, w2, b2 = params
    w1h = 0.5 * w1
    b1h = 0.5 * b1
    aff = jnp.stack([jnp.sum(w2 * w1h), b2[0] + jnp.sum(w2 * b1h)])
    pair = _pair_sum_matrix()

    orig_shape = x.shape
    flat = x.reshape(-1)                 # interleaved ... re, im, re, im ...
    n_flat = flat.shape[0]

    rows = -(-n_flat // LANE)
    tile_rows = min(TARGET_TILE_ROWS, _round_up(rows, 8))
    padded_rows = _round_up(rows, tile_rows)
    pad = padded_rows * LANE - n_flat
    if pad:
        flat = jnp.pad(flat, (0, pad))
    xf = flat.reshape(padded_rows, LANE)
    grid = (padded_rows // tile_rows,)

    smem = pl.BlockSpec(memory_space=pltpu.MemorySpace.SMEM)
    tile = pl.BlockSpec((tile_rows, LANE), lambda i: (i, 0))
    pair_spec = pl.BlockSpec((LANE, LANE), lambda i: (0, 0))

    out = pl.pallas_call(
        _nlin_kernel,
        out_shape=jax.ShapeDtypeStruct((padded_rows, LANE), x.dtype),
        grid=grid,
        in_specs=[smem, smem, smem, smem, pair_spec, tile],
        out_specs=tile,
        compiler_params=pltpu.CompilerParams(dimension_semantics=("parallel",)),
    )(w1h, b1h, w2, aff, pair, xf)

    out = out.reshape(-1)
    if pad:
        out = out[:n_flat]
    return out.reshape(orig_shape)


def init_params(key):
    """Deterministic init mirroring AmplitudeAwareNonlin.__init__.

    Linear(1,16): W1 [16,1], b1 [16]  (torch default, fan_in=1 -> U(-1,1))
    Linear(16,1): W2 zeroed, b2 filled with 1.0   (module's with-no-grad init)
    We pass W1[:,0] and W2[0,:] as vectors.
    """
    k1, k2 = jax.random.split(key)
    w1 = jax.random.uniform(k1, (HIDDEN,), jnp.float32, -1.0, 1.0)
    b1 = jax.random.uniform(k2, (HIDDEN,), jnp.float32, -1.0, 1.0)
    w2 = jnp.zeros((HIDDEN,), jnp.float32)
    b2 = jnp.ones((1,), jnp.float32)
    return w1, b1, w2, b2


def reference(x, params):
    w1, b1, w2, b2 = params
    amp = x[..., 0] ** 2 + x[..., 1] ** 2
    h = amp[..., None] * w1 + b1
    h = h * jax.nn.sigmoid(h)
    scaling = jnp.sum(h * w2, axis=-1) + b2[0]
    return x * scaling[..., None]


if __name__ == "__main__":
    key = jax.random.PRNGKey(0)
    kx, kx2, kp, kw, kb = jax.random.split(key, 5)

    # n_channels = 4; x layout [batch, channels, seq, 2] (real/imag last).
    x = jax.random.normal(kx, (2, 4, 16, 2), jnp.float32)

    # 1) Params exactly as produced by __init__ (zero last-layer weight,
    #    unit bias -> scaling == 1 -> identity).
    params = init_params(kp)
    out = jax.block_until_ready(learnable_nlin_core(x, params))
    ref = reference(x, params)
    assert jnp.allclose(out, ref, atol=1e-5, rtol=1e-5)
    assert jnp.allclose(out, x, atol=1e-5, rtol=1e-5)

    # 2) Perturbed last-layer params to exercise the full MLP path in-kernel.
    w1, b1, _, _ = params
    w2 = 0.1 * jax.random.normal(kw, (HIDDEN,), jnp.float32)
    b2 = jnp.array([0.5], jnp.float32)
    params2 = (w1, b1, w2, b2)
    out2 = jax.block_until_ready(learnable_nlin_core(x, params2))
    ref2 = reference(x, params2)
    assert jnp.allclose(out2, ref2, atol=1e-4, rtol=1e-4)

    # 3) Larger input: exercises the (1024,128) tiles, multi-step grid and
    #    the zero-padding / trim path.
    x_big = jax.random.normal(kx2, (3, 4, 6000, 2), jnp.float32)
    out3 = jax.block_until_ready(learnable_nlin_core(x_big, params2))
    ref3 = reference(x_big, params2)
    assert jnp.allclose(out3, ref3, atol=1e-4, rtol=1e-4)

    print("KERNEL_OK")
</pallas_src>

<mosaic_0001>
module attributes {stable_mosaic.version = 11 : i64} {
  func.func @_nlin_kernel(%arg0: i32, %arg1: memref<16xf32, #tpu.memory_space<smem>>, %arg2: memref<16xf32, #tpu.memory_space<smem>>, %arg3: memref<16xf32, #tpu.memory_space<smem>>, %arg4: memref<2xf32, #tpu.memory_space<smem>>, %arg5: memref<128x128xf32, #tpu.memory_space<vmem>>, %arg6: memref<8x128xf32, #tpu.memory_space<vmem>>, %arg7: memref<8x128xf32, #tpu.memory_space<vmem>>) attributes {dimension_semantics = [#tpu.dimension_semantics<parallel>], iteration_bounds = array<i64: 1>, scalar_prefetch = 0 : i64, scratch_operands = 0 : i64, tpu.core_type = #tpu.core_type<tc>, window_params = [{transform_indices = @transform_0, window_bounds = array<i64: 16>}, {transform_indices = @transform_1, window_bounds = array<i64: 16>}, {transform_indices = @transform_2, window_bounds = array<i64: 16>}, {transform_indices = @transform_3, window_bounds = array<i64: 2>}, {pipeline_mode = #tpu.pipeline_mode<synchronous>, transform_indices = @transform_4, window_bounds = array<i64: 128, 128>}, {transform_indices = @transform_5, window_bounds = array<i64: 8, 128>}, {transform_indices = @transform_6, window_bounds = array<i64: 8, 128>}]} {
    %c0 = arith.constant 0 : index
    %c0_0 = arith.constant 0 : index
    %0 = vector.load %arg6[%c0, %c0_0] : memref<8x128xf32, #tpu.memory_space<vmem>>, vector<8x128xf32>
    %1 = arith.mulf %0, %0 : vector<8x128xf32>
    %c0_1 = arith.constant 0 : index
    %c0_2 = arith.constant 0 : index
    %2 = vector.load %arg5[%c0_1, %c0_2] : memref<128x128xf32, #tpu.memory_space<vmem>>, vector<128x128xf32>
    %cst = arith.constant dense<0.000000e+00> : vector<8x128xf32>
    %3 = tpu.matmul %1, %2, %cst {dimension_numbers = #tpu.dot_dimension_numbers<[1], [0], [0], [1], [0, 0, 1, 1], [], []>} : vector<8x128xf32>, vector<128x128xf32>, vector<8x128xf32> -> vector<8x128xf32>
    %c0_3 = arith.constant 0 : index
    %4 = memref.load %arg1[%c0_3] : memref<16xf32, #tpu.memory_space<smem>>
    %c1 = arith.constant 1 : index
    %5 = memref.load %arg1[%c1] : memref<16xf32, #tpu.memory_space<smem>>
    %c2 = arith.constant 2 : index
    %6 = memref.load %arg1[%c2] : memref<16xf32, #tpu.memory_space<smem>>
    %c3 = arith.constant 3 : index
    %7 = memref.load %arg1[%c3] : memref<16xf32, #tpu.memory_space<smem>>
    %c4 = arith.constant 4 : index
    %8 = memref.load %arg1[%c4] : memref<16xf32, #tpu.memory_space<smem>>
    %c5 = arith.constant 5 : index
    %9 = memref.load %arg1[%c5] : memref<16xf32, #tpu.memory_space<smem>>
    %c6 = arith.constant 6 : index
    %10 = memref.load %arg1[%c6] : memref<16xf32, #tpu.memory_space<smem>>
    %c7 = arith.constant 7 : index
    %11 = memref.load %arg1[%c7] : memref<16xf32, #tpu.memory_space<smem>>
    %c8 = arith.constant 8 : index
    %12 = memref.load %arg1[%c8] : memref<16xf32, #tpu.memory_space<smem>>
    %c9 = arith.constant 9 : index
    %13 = memref.load %arg1[%c9] : memref<16xf32, #tpu.memory_space<smem>>
    %c10 = arith.constant 10 : index
    %14 = memref.load %arg1[%c10] : memref<16xf32, #tpu.memory_space<smem>>
    %c11 = arith.constant 11 : index
    %15 = memref.load %arg1[%c11] : memref<16xf32, #tpu.memory_space<smem>>
    %c12 = arith.constant 12 : index
    %16 = memref.load %arg1[%c12] : memref<16xf32, #tpu.memory_space<smem>>
    %c13 = arith.constant 13 : index
    %17 = memref.load %arg1[%c13] : memref<16xf32, #tpu.memory_space<smem>>
    %c14 = arith.constant 14 : index
    %18 = memref.load %arg1[%c14] : memref<16xf32, #tpu.memory_space<smem>>
    %c15 = arith.constant 15 : index
    %19 = memref.load %arg1[%c15] : memref<16xf32, #tpu.memory_space<smem>>
    %c0_4 = arith.constant 0 : index
    %20 = memref.load %arg2[%c0_4] : memref<16xf32, #tpu.memory_space<smem>>
    %c1_5 = arith.constant 1 : index
    %21 = memref.load %arg2[%c1_5] : memref<16xf32, #tpu.memory_space<smem>>
    %c2_6 = arith.constant 2 : index
    %22 = memref.load %arg2[%c2_6] : memref<16xf32, #tpu.memory_space<smem>>
    %c3_7 = arith.constant 3 : index
    %23 = memref.load %arg2[%c3_7] : memref<16xf32, #tpu.memory_space<smem>>
    %c4_8 = arith.constant 4 : index
    %24 = memref.load %arg2[%c4_8] : memref<16xf32, #tpu.memory_space<smem>>
    %c5_9 = arith.constant 5 : index
    %25 = memref.load %arg2[%c5_9] : memref<16xf32, #tpu.memory_space<smem>>
    %c6_10 = arith.constant 6 : index
    %26 = memref.load %arg2[%c6_10] : memref<16xf32, #tpu.memory_space<smem>>
    %c7_11 = arith.constant 7 : index
    %27 = memref.load %arg2[%c7_11] : memref<16xf32, #tpu.memory_space<smem>>
    %c8_12 = arith.constant 8 : index
    %28 = memref.load %arg2[%c8_12] : memref<16xf32, #tpu.memory_space<smem>>
    %c9_13 = arith.constant 9 : index
    %29 = memref.load %arg2[%c9_13] : memref<16xf32, #tpu.memory_space<smem>>
    %c10_14 = arith.constant 10 : index
    %30 = memref.load %arg2[%c10_14] : memref<16xf32, #tpu.memory_space<smem>>
    %c11_15 = arith.constant 11 : index
    %31 = memref.load %arg2[%c11_15] : memref<16xf32, #tpu.memory_space<smem>>
    %c12_16 = arith.constant 12 : index
    %32 = memref.load %arg2[%c12_16] : memref<16xf32, #tpu.memory_space<smem>>
    %c13_17 = arith.constant 13 : index
    %33 = memref.load %arg2[%c13_17] : memref<16xf32, #tpu.memory_space<smem>>
    %c14_18 = arith.constant 14 : index
    %34 = memref.load %arg2[%c14_18] : memref<16xf32, #tpu.memory_space<smem>>
    %c15_19 = arith.constant 15 : index
    %35 = memref.load %arg2[%c15_19] : memref<16xf32, #tpu.memory_space<smem>>
    %c0_20 = arith.constant 0 : index
    %36 = memref.load %arg3[%c0_20] : memref<16xf32, #tpu.memory_space<smem>>
    %c1_21 = arith.constant 1 : index
    %37 = memref.load %arg3[%c1_21] : memref<16xf32, #tpu.memory_space<smem>>
    %c2_22 = arith.constant 2 : index
    %38 = memref.load %arg3[%c2_22] : memref<16xf32, #tpu.memory_space<smem>>
    %c3_23 = arith.constant 3 : index
    %39 = memref.load %arg3[%c3_23] : memref<16xf32, #tpu.memory_space<smem>>
    %c4_24 = arith.constant 4 : index
    %40 = memref.load %arg3[%c4_24] : memref<16xf32, #tpu.memory_space<smem>>
    %c5_25 = arith.constant 5 : index
    %41 = memref.load %arg3[%c5_25] : memref<16xf32, #tpu.memory_space<smem>>
    %c6_26 = arith.constant 6 : index
    %42 = memref.load %arg3[%c6_26] : memref<16xf32, #tpu.memory_space<smem>>
    %c7_27 = arith.constant 7 : index
    %43 = memref.load %arg3[%c7_27] : memref<16xf32, #tpu.memory_space<smem>>
    %c8_28 = arith.constant 8 : index
    %44 = memref.load %arg3[%c8_28] : memref<16xf32, #tpu.memory_space<smem>>
    %c9_29 = arith.constant 9 : index
    %45 = memref.load %arg3[%c9_29] : memref<16xf32, #tpu.memory_space<smem>>
    %c10_30 = arith.constant 10 : index
    %46 = memref.load %arg3[%c10_30] : memref<16xf32, #tpu.memory_space<smem>>
    %c11_31 = arith.constant 11 : index
    %47 = memref.load %arg3[%c11_31] : memref<16xf32, #tpu.memory_space<smem>>
    %c12_32 = arith.constant 12 : index
    %48 = memref.load %arg3[%c12_32] : memref<16xf32, #tpu.memory_space<smem>>
    %c13_33 = arith.constant 13 : index
    %49 = memref.load %arg3[%c13_33] : memref<16xf32, #tpu.memory_space<smem>>
    %c14_34 = arith.constant 14 : index
    %50 = memref.load %arg3[%c14_34] : memref<16xf32, #tpu.memory_space<smem>>
    %c15_35 = arith.constant 15 : index
    %51 = memref.load %arg3[%c15_35] : memref<16xf32, #tpu.memory_space<smem>>
    %c0_36 = arith.constant 0 : index
    %52 = memref.load %arg4[%c0_36] : memref<2xf32, #tpu.memory_space<smem>>
    %c1_37 = arith.constant 1 : index
    %53 = memref.load %arg4[%c1_37] : memref<2xf32, #tpu.memory_space<smem>>
    %cst_38 = arith.constant 0.000000e+00 : f32
    %54 = vector.broadcast %cst_38 : f32 to vector<8x128xf32>
    %55 = vector.broadcast %4 : f32 to vector<8x128xf32>
    %56 = arith.mulf %3, %55 : vector<8x128xf32>
    %57 = vector.broadcast %20 : f32 to vector<8x128xf32>
    %58 = arith.addf %56, %57 : vector<8x128xf32>
    %59 = vector.broadcast %36 : f32 to vector<8x128xf32>
    %60 = arith.mulf %59, %58 : vector<8x128xf32>
    %61 = math.tanh %58 : vector<8x128xf32>
    %62 = arith.mulf %60, %61 : vector<8x128xf32>
    %63 = arith.addf %54, %62 : vector<8x128xf32>
    %64 = vector.broadcast %5 : f32 to vector<8x128xf32>
    %65 = arith.mulf %3, %64 : vector<8x128xf32>
    %66 = vector.broadcast %21 : f32 to vector<8x128xf32>
    %67 = arith.addf %65, %66 : vector<8x128xf32>
    %68 = vector.broadcast %37 : f32 to vector<8x128xf32>
    %69 = arith.mulf %68, %67 : vector<8x128xf32>
    %70 = math.tanh %67 : vector<8x128xf32>
    %71 = arith.mulf %69, %70 : vector<8x128xf32>
    %72 = arith.addf %63, %71 : vector<8x128xf32>
    %73 = vector.broadcast %6 : f32 to vector<8x128xf32>
    %74 = arith.mulf %3, %73 : vector<8x128xf32>
    %75 = vector.broadcast %22 : f32 to vector<8x128xf32>
    %76 = arith.addf %74, %75 : vector<8x128xf32>
    %77 = vector.broadcast %38 : f32 to vector<8x128xf32>
    %78 = arith.mulf %77, %76 : vector<8x128xf32>
    %79 = math.tanh %76 : vector<8x128xf32>
    %80 = arith.mulf %78, %79 : vector<8x128xf32>
    %81 = arith.addf %72, %80 : vector<8x128xf32>
    %82 = vector.broadcast %7 : f32 to vector<8x128xf32>
    %83 = arith.mulf %3, %82 : vector<8x128xf32>
    %84 = vector.broadcast %23 : f32 to vector<8x128xf32>
    %85 = arith.addf %83, %84 : vector<8x128xf32>
    %86 = vector.broadcast %39 : f32 to vector<8x128xf32>
    %87 = arith.mulf %86, %85 : vector<8x128xf32>
    %88 = math.tanh %85 : vector<8x128xf32>
    %89 = arith.mulf %87, %88 : vector<8x128xf32>
    %90 = arith.addf %81, %89 : vector<8x128xf32>
    %91 = vector.broadcast %8 : f32 to vector<8x128xf32>
    %92 = arith.mulf %3, %91 : vector<8x128xf32>
    %93 = vector.broadcast %24 : f32 to vector<8x128xf32>
    %94 = arith.addf %92, %93 : vector<8x128xf32>
    %95 = vector.broadcast %40 : f32 to vector<8x128xf32>
    %96 = arith.mulf %95, %94 : vector<8x128xf32>
    %97 = math.tanh %94 : vector<8x128xf32>
    %98 = arith.mulf %96, %97 : vector<8x128xf32>
    %99 = arith.addf %90, %98 : vector<8x128xf32>
    %100 = vector.broadcast %9 : f32 to vector<8x128xf32>
    %101 = arith.mulf %3, %100 : vector<8x128xf32>
    %102 = vector.broadcast %25 : f32 to vector<8x128xf32>
    %103 = arith.addf %101, %102 : vector<8x128xf32>
    %104 = vector.broadcast %41 : f32 to vector<8x128xf32>
    %105 = arith.mulf %104, %103 : vector<8x128xf32>
    %106 = math.tanh %103 : vector<8x128xf32>
    %107 = arith.mulf %105, %106 : vector<8x128xf32>
    %108 = arith.addf %99, %107 : vector<8x128xf32>
    %109 = vector.broadcast %10 : f32 to vector<8x128xf32>
    %110 = arith.mulf %3, %109 : vector<8x128xf32>
    %111 = vector.broadcast %26 : f32 to vector<8x128xf32>
    %112 = arith.addf %110, %111 : vector<8x128xf32>
    %113 = vector.broadcast %42 : f32 to vector<8x128xf32>
    %114 = arith.mulf %113, %112 : vector<8x128xf32>
    %115 = math.tanh %112 : vector<8x128xf32>
    %116 = arith.mulf %114, %115 : vector<8x128xf32>
    %117 = arith.addf %108, %116 : vector<8x128xf32>
    %118 = vector.broadcast %11 : f32 to vector<8x128xf32>
    %119 = arith.mulf %3, %118 : vector<8x128xf32>
    %120 = vector.broadcast %27 : f32 to vector<8x128xf32>
    %121 = arith.addf %119, %120 : vector<8x128xf32>
    %122 = vector.broadcast %43 : f32 to vector<8x128xf32>
    %123 = arith.mulf %122, %121 : vector<8x128xf32>
    %124 = math.tanh %121 : vector<8x128xf32>
    %125 = arith.mulf %123, %124 : vector<8x128xf32>
    %126 = arith.addf %117, %125 : vector<8x128xf32>
    %127 = vector.broadcast %12 : f32 to vector<8x128xf32>
    %128 = arith.mulf %3, %127 : vector<8x128xf32>
    %129 = vector.broadcast %28 : f32 to vector<8x128xf32>
    %130 = arith.addf %128, %129 : vector<8x128xf32>
    %131 = vector.broadcast %44 : f32 to vector<8x128xf32>
    %132 = arith.mulf %131, %130 : vector<8x128xf32>
    %133 = math.tanh %130 : vector<8x128xf32>
    %134 = arith.mulf %132, %133 : vector<8x128xf32>
    %135 = arith.addf %126, %134 : vector<8x128xf32>
    %136 = vector.broadcast %13 : f32 to vector<8x128xf32>
    %137 = arith.mulf %3, %136 : vector<8x128xf32>
    %138 = vector.broadcast %29 : f32 to vector<8x128xf32>
    %139 = arith.addf %137, %138 : vector<8x128xf32>
    %140 = vector.broadcast %45 : f32 to vector<8x128xf32>
    %141 = arith.mulf %140, %139 : vector<8x128xf32>
    %142 = math.tanh %139 : vector<8x128xf32>
    %143 = arith.mulf %141, %142 : vector<8x128xf32>
    %144 = arith.addf %135, %143 : vector<8x128xf32>
    %145 = vector.broadcast %14 : f32 to vector<8x128xf32>
    %146 = arith.mulf %3, %145 : vector<8x128xf32>
    %147 = vector.broadcast %30 : f32 to vector<8x128xf32>
    %148 = arith.addf %146, %147 : vector<8x128xf32>
    %149 = vector.broadcast %46 : f32 to vector<8x128xf32>
    %150 = arith.mulf %149, %148 : vector<8x128xf32>
    %151 = math.tanh %148 : vector<8x128xf32>
    %152 = arith.mulf %150, %151 : vector<8x128xf32>
    %153 = arith.addf %144, %152 : vector<8x128xf32>
    %154 = vector.broadcast %15 : f32 to vector<8x128xf32>
    %155 = arith.mulf %3, %154 : vector<8x128xf32>
    %156 = vector.broadcast %31 : f32 to vector<8x128xf32>
    %157 = arith.addf %155, %156 : vector<8x128xf32>
    %158 = vector.broadcast %47 : f32 to vector<8x128xf32>
    %159 = arith.mulf %158, %157 : vector<8x128xf32>
    %160 = math.tanh %157 : vector<8x128xf32>
    %161 = arith.mulf %159, %160 : vector<8x128xf32>
    %162 = arith.addf %153, %161 : vector<8x128xf32>
    %163 = vector.broadcast %16 : f32 to vector<8x128xf32>
    %164 = arith.mulf %3, %163 : vector<8x128xf32>
    %165 = vector.broadcast %32 : f32 to vector<8x128xf32>
    %166 = arith.addf %164, %165 : vector<8x128xf32>
    %167 = vector.broadcast %48 : f32 to vector<8x128xf32>
    %168 = arith.mulf %167, %166 : vector<8x128xf32>
    %169 = math.tanh %166 : vector<8x128xf32>
    %170 = arith.mulf %168, %169 : vector<8x128xf32>
    %171 = arith.addf %162, %170 : vector<8x128xf32>
    %172 = vector.broadcast %17 : f32 to vector<8x128xf32>
    %173 = arith.mulf %3, %172 : vector<8x128xf32>
    %174 = vector.broadcast %33 : f32 to vector<8x128xf32>
    %175 = arith.addf %173, %174 : vector<8x128xf32>
    %176 = vector.broadcast %49 : f32 to vector<8x128xf32>
    %177 = arith.mulf %176, %175 : vector<8x128xf32>
    %178 = math.tanh %175 : vector<8x128xf32>
    %179 = arith.mulf %177, %178 : vector<8x128xf32>
    %180 = arith.addf %171, %179 : vector<8x128xf32>
    %181 = vector.broadcast %18 : f32 to vector<8x128xf32>
    %182 = arith.mulf %3, %181 : vector<8x128xf32>
    %183 = vector.broadcast %34 : f32 to vector<8x128xf32>
    %184 = arith.addf %182, %183 : vector<8x128xf32>
    %185 = vector.broadcast %50 : f32 to vector<8x128xf32>
    %186 = arith.mulf %185, %184 : vector<8x128xf32>
    %187 = math.tanh %184 : vector<8x128xf32>
    %188 = arith.mulf %186, %187 : vector<8x128xf32>
    %189 = arith.addf %180, %188 : vector<8x128xf32>
    %190 = vector.broadcast %19 : f32 to vector<8x128xf32>
    %191 = arith.mulf %3, %190 : vector<8x128xf32>
    %192 = vector.broadcast %35 : f32 to vector<8x128xf32>
    %193 = arith.addf %191, %192 : vector<8x128xf32>
    %194 = vector.broadcast %51 : f32 to vector<8x128xf32>
    %195 = arith.mulf %194, %193 : vector<8x128xf32>
    %196 = math.tanh %193 : vector<8x128xf32>
    %197 = arith.mulf %195, %196 : vector<8x128xf32>
    %198 = arith.addf %189, %197 : vector<8x128xf32>
    %199 = vector.broadcast %52 : f32 to vector<8x128xf32>
    %200 = arith.mulf %3, %199 : vector<8x128xf32>
    %201 = vector.broadcast %53 : f32 to vector<8x128xf32>
    %202 = arith.addf %200, %201 : vector<8x128xf32>
    %203 = arith.addf %202, %198 : vector<8x128xf32>
    %204 = arith.mulf %0, %203 : vector<8x128xf32>
    %c0_39 = arith.constant 0 : index
    %c0_40 = arith.constant 0 : index
    %205 = vector.load %arg7[%c0_39, %c0_40] : memref<8x128xf32, #tpu.memory_space<vmem>>, vector<8x128xf32>
    tpu.vector_store %arg7[%c0_39, %c0_40], %204 {strides = array<i32>} : memref<8x128xf32, #tpu.memory_space<vmem>>, vector<8x128xf32>,
    return
  }
  func.func @transform_0(%arg0: i32) -> i32 {
    %c0_i32 = arith.constant 0 : i32
    %c0_i32_0 = arith.constant 0 : i32
    return %c0_i32 : i32
  }
  func.func @transform_1(%arg0: i32) -> i32 {
    %c0_i32 = arith.constant 0 : i32
    %c0_i32_0 = arith.constant 0 : i32
    return %c0_i32 : i32
  }
  func.func @transform_2(%arg0: i32) -> i32 {
    %c0_i32 = arith.constant 0 : i32
    %c0_i32_0 = arith.constant 0 : i32
    return %c0_i32 : i32
  }
  func.func @transform_3(%arg0: i32) -> i32 {
    %c0_i32 = arith.constant 0 : i32
    %c0_i32_0 = arith.constant 0 : i32
    return %c0_i32 : i32
  }
  func.func @transform_4(%arg0: i32) -> (i32, i32) {
    %c0_i32 = arith.constant 0 : i32
    %c0_i32_0 = arith.constant 0 : i32
    %c0_i32_1 = arith.constant 0 : i32
    return %c0_i32, %c0_i32_0 : i32, i32
  }
  func.func @transform_5(%arg0: i32) -> (i32, i32) {
    %c0_i32 = arith.constant 0 : i32
    %c0_i32_0 = arith.constant 0 : i32
    return %arg0, %c0_i32 : i32, i32
  }
  func.func @transform_6(%arg0: i32) -> (i32, i32) {
    %c0_i32 = arith.constant 0 : i32
    %c0_i32_0 = arith.constant 0 : i32
    return %arg0, %c0_i32 : i32, i32
  }
}

</mosaic_0001>

<llo_original>
// kernel: learnable_nlin_core.1
$region0: #{learnable_nlin_core.1}
  #allocation0 [shape = 'u32[]', space=smem, size = 0x4, offset = 0x4, fixed_abs, tag = 'smem constant byte address 0x4 - core index']
  #allocation1 [shape = 'u32[144,128]{1,0:T(1,128)}', space=vmem, size = 0x12000, scoped, tag = 'internal scratch']
  %s0 = inlined_call_operand.vmem [shape: f32[16], index: 0, kind: input, shape index: {}]
  %s1 = inlined_call_operand.vmem [shape: f32[16], index: 1, kind: input, shape index: {}]
  %s2 = inlined_call_operand.vmem [shape: f32[16], index: 2, kind: input, shape index: {}]
  %s3 = inlined_call_operand.vmem [shape: f32[2], index: 3, kind: input, shape index: {}]
  %s4 = inlined_call_operand.vmem [shape: f32[128,128], index: 4, kind: input, shape index: {}]
  %s5 = inlined_call_operand.vmem [shape: f32[8,128], index: 5, kind: input, shape index: {}]
  %s6 = inlined_call_operand.vmem [shape: f32[8,128], index: 6, kind: output, shape index: {}]
  %s7 = sld [smem:[#allocation0]]
  $region50: #{learnable_nlin_core.1} parent=0
    _
  %s9 = ssub.s32 1, %s7
  %s10 = scalar_select 0, %s9, %s7
  $region1: #{learnable_nlin_core.1} parent=0
    #allocation2 [shape = 'u8[512]{0}', space=smem, size = 0x200, scoped, tag = 'input window, operand 0, single buffered']
    #allocation3 [shape = 's32[1]{0}', space=sflag, size = 0x4, scoped, tag = 'scoped memory for learnable_nlin_core.1']
    #allocation4 [shape = 'u8[512]{0}', space=smem, size = 0x200, scoped, tag = 'input window, operand 1, single buffered']
    #allocation5 [shape = 's32[1]{0}', space=sflag, size = 0x4, scoped, tag = 'scoped memory for learnable_nlin_core.1']
    #allocation6 [shape = 'u8[512]{0}', space=smem, size = 0x200, scoped, tag = 'input window, operand 2, single buffered']
    #allocation7 [shape = 'u8[512]{0}', space=smem, size = 0x200, scoped, tag = 'input window, operand 3, single buffered']
    #allocation8 [shape = 's32[1]{0}', space=sflag, size = 0x4, scoped, tag = 'scoped memory for learnable_nlin_core.1']
    %11 = vsyncpa [#allocation3], 0
    %12 = vsyncpa [#allocation5], 0
    %13 = vsyncpa [#allocation8], 0
    // Predicated region
    $region2: #{learnable_nlin_core.1} parent=1 // pred_check
      _
    $region3: #{learnable_nlin_core.1} parent=1 // pred_check_branch
      %15 = sbr.rel (0) target = $region5
    $region4: #{learnable_nlin_core.1} parent=1 // pred_region
      %s17 = ssub.s32 16, 16
      %18 = vsyncadd [#allocation3], %s17
      %s20 = sshll.u32 %s0, 4
      %s21 = int_to_ptr.vmem [resolvable:$true] %s20
      %23 = dma.vmem_to_smem %s21, 16, [#allocation2], [#allocation3]
    $region5: #{learnable_nlin_core.1} parent=1 // pred_fallthru
      _
    // Predicated region
    $region6: #{learnable_nlin_core.1} parent=1 // pred_check
      _
    $region7: #{learnable_nlin_core.1} parent=1 // pred_check_branch
      %25 = sbr.rel (0) target = $region9
    $region8: #{learnable_nlin_core.1} parent=1 // pred_region
      %s27 = ssub.s32 16, 16
      %28 = vsyncadd [#allocation5], %s27
      %s30 = sshll.u32 %s1, 4
      %s31 = int_to_ptr.vmem [resolvable:$true] %s30
      %33 = dma.vmem_to_smem %s31, 16, [#allocation4], [#allocation5]
    $region9: #{learnable_nlin_core.1} parent=1 // pred_fallthru
      _
    // Predicated region
    $region10: #{learnable_nlin_core.1} parent=1 // pred_check
      _
    $region11: #{learnable_nlin_core.1} parent=1 // pred_check_branch
      %35 = sbr.rel (0) target = $region13
    $region12: #{learnable_nlin_core.1} parent=1 // pred_region
      %s37 = ssub.s32 16, 16
      %38 = vsyncadd [#allocation5], %s37
      %s40 = sshll.u32 %s2, 4
      %s41 = int_to_ptr.vmem [resolvable:$true] %s40
      %43 = dma.vmem_to_smem %s41, 16, [#allocation6], [#allocation5]
    $region13: #{learnable_nlin_core.1} parent=1 // pred_fallthru
      _
    // Predicated region
    $region14: #{learnable_nlin_core.1} parent=1 // pred_check
      _
    $region15: #{learnable_nlin_core.1} parent=1 // pred_check_branch
      %45 = sbr.rel (0) target = $region17
    $region16: #{learnable_nlin_core.1} parent=1 // pred_region
      %s47 = ssub.s32 16, 16
      %48 = vsyncadd [#allocation8], %s47
      %s50 = sshll.u32 %s3, 4
      %s51 = int_to_ptr.vmem [resolvable:$true] %s50
      %53 = dma.vmem_to_smem %s51, 16, [#allocation7], [#allocation8]
    $region17: #{learnable_nlin_core.1} parent=1 // pred_fallthru
      _
    // Predicated region
    $region18: #{learnable_nlin_core.1} parent=1 // pred_check
      _
    $region19: #{learnable_nlin_core.1} parent=1 // pred_check_branch
      %55 = sbr.rel (0) target = $region21
    $region20: #{learnable_nlin_core.1} parent=1 // pred_region
      _
    $region21: #{learnable_nlin_core.1} parent=1 // pred_fallthru
      _
    // Predicated region
    $region22: #{learnable_nlin_core.1} parent=1 // pred_check
      _
    $region23: #{learnable_nlin_core.1} parent=1 // pred_check_branch
      %57 = sbr.rel (0) target = $region25
    $region24: #{learnable_nlin_core.1} parent=1 // pred_region
      _
    $region25: #{learnable_nlin_core.1} parent=1 // pred_fallthru
      _
    // Predicated region
    $region26: #{learnable_nlin_core.1} parent=1 // pred_check
      _
    $region27: #{learnable_nlin_core.1} parent=1 // pred_check_branch
      %59 = sbr.rel (0) target = $region29
    $region28: #{learnable_nlin_core.1} parent=1 // pred_region
      %60 = dma.done [#allocation3], 16
    $region29: #{learnable_nlin_core.1} parent=1 // pred_fallthru
      _
    // Predicated region
    $region30: #{learnable_nlin_core.1} parent=1 // pred_check
      _
    $region31: #{learnable_nlin_core.1} parent=1 // pred_check_branch
      %62 = sbr.rel (0) target = $region33
    $region32: #{learnable_nlin_core.1} parent=1 // pred_region
      %63 = dma.done [#allocation5], 16
    $region33: #{learnable_nlin_core.1} parent=1 // pred_fallthru
      _
    // Predicated region
    $region34: #{learnable_nlin_core.1} parent=1 // pred_check
      _
    $region35: #{learnable_nlin_core.1} parent=1 // pred_check_branch
      %65 = sbr.rel (0) target = $region37
    $region36: #{learnable_nlin_core.1} parent=1 // pred_region
      %66 = dma.done [#allocation5], 16
    $region37: #{learnable_nlin_core.1} parent=1 // pred_fallthru
      _
    // Predicated region
    $region38: #{learnable_nlin_core.1} parent=1 // pred_check
      _
    $region39: #{learnable_nlin_core.1} parent=1 // pred_check_branch
      %68 = sbr.rel (0) target = $region41
    $region40: #{learnable_nlin_core.1} parent=1 // pred_region
      %69 = dma.done [#allocation8], 16
    $region41: #{learnable_nlin_core.1} parent=1 // pred_fallthru
      _
    %70 = sfence
    %v71 = vld [vmem:[%s5] sm:$0xff]
    %v72 = vmul.f32 %v71, %v71
    %v73 = vld [vmem:[%s4] sm:$0xff]
    %v74 = vld [vmem:[%s4 + $0x8] sm:$0xff]
    %v75 = vld [vmem:[%s4 + $0x10] sm:$0xff]
    %v76 = vld [vmem:[%s4 + $0x18] sm:$0xff]
    %v77 = vld [vmem:[%s4 + $0x20] sm:$0xff]
    %v78 = vld [vmem:[%s4 + $0x28] sm:$0xff]
    %v79 = vld [vmem:[%s4 + $0x30] sm:$0xff]
    %v80 = vld [vmem:[%s4 + $0x38] sm:$0xff]
    %v81 = vld [vmem:[%s4 + $0x40] sm:$0xff]
    %v82 = vld [vmem:[%s4 + $0x48] sm:$0xff]
    %v83 = vld [vmem:[%s4 + $0x50] sm:$0xff]
    %v84 = vld [vmem:[%s4 + $0x58] sm:$0xff]
    %v85 = vld [vmem:[%s4 + $0x60] sm:$0xff]
    %v86 = vld [vmem:[%s4 + $0x68] sm:$0xff]
    %v87 = vld [vmem:[%s4 + $0x70] sm:$0xff]
    %v88 = vld [vmem:[%s4 + $0x78] sm:$0xff]
    %89 = vmatprep.subr.mxu0 0.0
    %90 = vmatpush1.msra.mxu0 %v88
    %91 = vmatprep.subr.mxu0 0.0
    %92 = vmatpush1.msra.mxu0 %v87
    %93 = vmatprep.subr.mxu0 0.0
    %94 = vmatpush1.msra.mxu0 %v86
    %95 = vmatprep.subr.mxu0 0.0
    %96 = vmatpush1.msra.mxu0 %v85
    %97 = vmatprep.subr.mxu0 0.0
    %98 = vmatpush1.msra.mxu0 %v84
    %99 = vmatprep.subr.mxu0 0.0
    %100 = vmatpush1.msra.mxu0 %v83
    %101 = vmatprep.subr.mxu0 0.0
    %102 = vmatpush1.msra.mxu0 %v82
    %103 = vmatprep.subr.mxu0 0.0
    %104 = vmatpush1.msra.mxu0 %v81
    %105 = vmatprep.subr.mxu0 0.0
    %106 = vmatpush1.msra.mxu0 %v80
    %107 = vmatprep.subr.mxu0 0.0
    %108 = vmatpush1.msra.mxu0 %v79
    %109 = vmatprep.subr.mxu0 0.0
    %110 = vmatpush1.msra.mxu0 %v78
    %111 = vmatprep.subr.mxu0 0.0
    %112 = vmatpush1.msra.mxu0 %v77
    %113 = vmatprep.subr.mxu0 0.0
    %114 = vmatpush1.msra.mxu0 %v76
    %115 = vmatprep.subr.mxu0 0.0
    %116 = vmatpush1.msra.mxu0 %v75
    %117 = vmatprep.subr.mxu0 0.0
    %118 = vmatpush1.msra.mxu0 %v74
    %119 = vmatprep.subr.mxu0 0.0
    %120 = vmatpush1.msra.mxu0 %v73
    %121 = vmatprep.subr.mxu0 0.0
    %122 = vmatpush2.msra.mxu0 0.0
    %123 = vmatprep.subr.mxu0 0.0
    %124 = vmatpush2.msra.mxu0 0.0
    %125 = vmatprep.subr.mxu0 0.0
    %126 = vmatpush2.msra.mxu0 0.0
    %127 = vmatprep.subr.mxu0 0.0
    %128 = vmatpush2.msra.mxu0 0.0
    %129 = vmatprep.subr.mxu0 0.0
    %130 = vmatpush2.msra.mxu0 0.0
    %131 = vmatprep.subr.mxu0 0.0
    %132 = vmatpush2.msra.mxu0 0.0
    %133 = vmatprep.subr.mxu0 0.0
    %134 = vmatpush2.msra.mxu0 0.0
    %135 = vmatprep.subr.mxu0 0.0
    %136 = vmatpush2.msra.mxu0 0.0
    %137 = vmatprep.subr.mxu0 0.0
    %138 = vmatpush2.msra.mxu0 0.0
    %139 = vmatprep.subr.mxu0 0.0
    %140 = vmatpush2.msra.mxu0 0.0
    %141 = vmatprep.subr.mxu0 0.0
    %142 = vmatpush2.msra.mxu0 0.0
    %143 = vmatprep.subr.mxu0 0.0
    %144 = vmatpush2.msra.mxu0 0.0
    %145 = vmatprep.subr.mxu0 0.0
    %146 = vmatpush2.msra.mxu0 0.0
    %147 = vmatprep.subr.mxu0 0.0
    %148 = vmatpush2.msra.mxu0 0.0
    %149 = vmatprep.subr.mxu0 0.0
    %150 = vmatpush2.msra.mxu0 0.0
    %151 = vmatprep.subr.mxu0 0.0
    %152 = vmatpush2.msra.mxu0 0.0
    %153 = vmatprep.mubr.f32.mxu0 0.0
    %154 = vmatmul.mubr.f32.gmra.mxu0 %v72
    %v155 = vpop.f32.mrf.mxu0
    %v156 = vadd.f32 0.0, %v155
    %v157 = vpop.f32.mrf.mxu0
    %158 = vdwg.mxu0
    %s159 = sld [smem:[#allocation2]]
    %s160 = sld [smem:[#allocation2 + $0x1]]
    %s161 = sld [smem:[#allocation2 + $0x2]]
    %s162 = sld [smem:[#allocation2 + $0x3]]
    %s163 = sld [smem:[#allocation2 + $0x4]]
    %s164 = sld [smem:[#allocation2 + $0x5]]
    %s165 = sld [smem:[#allocation2 + $0x6]]
    %s166 = sld [smem:[#allocation2 + $0x7]]
    %s167 = sld [smem:[#allocation2 + $0x8]]
    %s168 = sld [smem:[#allocation2 + $0x9]]
    %s169 = sld [smem:[#allocation2 + $0xa]]
    %s170 = sld [smem:[#allocation2 + $0xb]]
    %s171 = sld [smem:[#allocation2 + $0xc]]
    %s172 = sld [smem:[#allocation2 + $0xd]]
    %s173 = sld [smem:[#allocation2 + $0xe]]
    %s174 = sld [smem:[#allocation2 + $0xf]]
    %s175 = sld [smem:[#allocation4]]
    %s176 = sld [smem:[#allocation4 + $0x1]]
    %s177 = sld [smem:[#allocation4 + $0x2]]
    %s178 = sld [smem:[#allocation4 + $0x3]]
    %s179 = sld [smem:[#allocation4 + $0x4]]
    %s180 = sld [smem:[#allocation4 + $0x5]]
    %s181 = sld [smem:[#allocation4 + $0x6]]
    %s182 = sld [smem:[#allocation4 + $0x7]]
    %s183 = sld [smem:[#allocation4 + $0x8]]
    %s184 = sld [smem:[#allocation4 + $0x9]]
    %s185 = sld [smem:[#allocation4 + $0xa]]
    %s186 = sld [smem:[#allocation4 + $0xb]]
    %s187 = sld [smem:[#allocation4 + $0xc]]
    %s188 = sld [smem:[#allocation4 + $0xd]]
    %s189 = sld [smem:[#allocation4 + $0xe]]
    %s190 = sld [smem:[#allocation4 + $0xf]]
    %s191 = sld [smem:[#allocation6]]
    %s192 = sld [smem:[#allocation6 + $0x1]]
    %s193 = sld [smem:[#allocation6 + $0x2]]
    %s194 = sld [smem:[#allocation6 + $0x3]]
    %s195 = sld [smem:[#allocation6 + $0x4]]
    %s196 = sld [smem:[#allocation6 + $0x5]]
    %s197 = sld [smem:[#allocation6 + $0x6]]
    %s198 = sld [smem:[#allocation6 + $0x7]]
    %s199 = sld [smem:[#allocation6 + $0x8]]
    %s200 = sld [smem:[#allocation6 + $0x9]]
    %s201 = sld [smem:[#allocation6 + $0xa]]
    %s202 = sld [smem:[#allocation6 + $0xb]]
    %s203 = sld [smem:[#allocation6 + $0xc]]
    %s204 = sld [smem:[#allocation6 + $0xd]]
    %s205 = sld [smem:[#allocation6 + $0xe]]
    %s206 = sld [smem:[#allocation6 + $0xf]]
    %s207 = sld [smem:[#allocation7]]
    %s208 = sld [smem:[#allocation7 + $0x1]]
    %v209 = vstv %s159
    %v210 = vmul.f32 %v156, %v209
    %v211 = vstv %s175
    %v212 = vadd.f32 %v210, %v211
    %v213 = vstv %s191
    %v214 = vmul.f32 %v213, %v212
    %v215 = vtanh.pop %v212
    %v216 = vmul.f32 %v214, %v215
    %v217 = vadd.f32 %v216, 0.0
    %v218 = vstv %s160
    %v219 = vmul.f32 %v156, %v218
    %v220 = vstv %s176
    %v221 = vadd.f32 %v219, %v220
    %v222 = vstv %s192
    %v223 = vmul.f32 %v222, %v221
    %v224 = vtanh.pop %v221
    %v225 = vmul.f32 %v223, %v224
    %v226 = vadd.f32 %v217, %v225
    %v227 = vstv %s161
    %v228 = vmul.f32 %v156, %v227
    %v229 = vstv %s177
    %v230 = vadd.f32 %v228, %v229
    %v231 = vstv %s193
    %v232 = vmul.f32 %v231, %v230
    %v233 = vtanh.pop %v230
    %v234 = vmul.f32 %v232, %v233
    %v235 = vadd.f32 %v226, %v234
    %v236 = vstv %s162
    %v237 = vmul.f32 %v156, %v236
    %v238 = vstv %s178
    %v239 = vadd.f32 %v237, %v238
    %v240 = vstv %s194
    %v241 = vmul.f32 %v240, %v239
    %v242 = vtanh.pop %v239
    %v243 = vmul.f32 %v241, %v242
    %v244 = vadd.f32 %v235, %v243
    %v245 = vstv %s163
    %v246 = vmul.f32 %v156, %v245
    %v247 = vstv %s179
    %v248 = vadd.f32 %v246, %v247
    %v249 = vstv %s195
    %v250 = vmul.f32 %v249, %v248
    %v251 = vtanh.pop %v248
    %v252 = vmul.f32 %v250, %v251
    %v253 = vadd.f32 %v244, %v252
    %v254 = vstv %s164
    %v255 = vmul.f32 %v156, %v254
    %v256 = vstv %s180
    %v257 = vadd.f32 %v255, %v256
    %v258 = vstv %s196
    %v259 = vmul.f32 %v258, %v257
    %v260 = vtanh.pop %v257
    %v261 = vmul.f32 %v259, %v260
    %v262 = vadd.f32 %v253, %v261
    %v263 = vstv %s165
    %v264 = vmul.f32 %v156, %v263
    %v265 = vstv %s181
    %v266 = vadd.f32 %v264, %v265
    %v267 = vstv %s197
    %v268 = vmul.f32 %v267, %v266
    %v269 = vtanh.pop %v266
    %v270 = vmul.f32 %v268, %v269
    %v271 = vadd.f32 %v262, %v270
    %v272 = vstv %s166
    %v273 = vmul.f32 %v156, %v272
    %v274 = vstv %s182
    %v275 = vadd.f32 %v273, %v274
    %v276 = vstv %s198
    %v277 = vmul.f32 %v276, %v275
    %v278 = vtanh.pop %v275
    %v279 = vmul.f32 %v277, %v278
    %v280 = vadd.f32 %v271, %v279
    %v281 = vstv %s167
    %v282 = vmul.f32 %v156, %v281
    %v283 = vstv %s183
    %v284 = vadd.f32 %v282, %v283
    %v285 = vstv %s199
    %v286 = vmul.f32 %v285, %v284
    %v287 = vtanh.pop %v284
    %v288 = vmul.f32 %v286, %v287
    %v289 = vadd.f32 %v280, %v288
    %v290 = vstv %s168
    %v291 = vmul.f32 %v156, %v290
    %v292 = vstv %s184
    %v293 = vadd.f32 %v291, %v292
    %v294 = vstv %s200
    %v295 = vmul.f32 %v294, %v293
    %v296 = vtanh.pop %v293
    %v297 = vmul.f32 %v295, %v296
    %v298 = vadd.f32 %v289, %v297
    %v299 = vstv %s169
    %v300 = vmul.f32 %v156, %v299
    %v301 = vstv %s185
    %v302 = vadd.f32 %v300, %v301
    %v303 = vstv %s201
    %v304 = vmul.f32 %v303, %v302
    %v305 = vtanh.pop %v302
    %v306 = vmul.f32 %v304, %v305
    %v307 = vadd.f32 %v298, %v306
    %v308 = vstv %s170
    %v309 = vmul.f32 %v156, %v308
    %v310 = vstv %s186
    %v311 = vadd.f32 %v309, %v310
    %v312 = vstv %s202
    %v313 = vmul.f32 %v312, %v311
    %v314 = vtanh.pop %v311
    %v315 = vmul.f32 %v313, %v314
    %v316 = vadd.f32 %v307, %v315
    %v317 = vstv %s171
    %v318 = vmul.f32 %v156, %v317
    %v319 = vstv %s187
    %v320 = vadd.f32 %v318, %v319
    %v321 = vstv %s203
    %v322 = vmul.f32 %v321, %v320
    %v323 = vtanh.pop %v320
    %v324 = vmul.f32 %v322, %v323
    %v325 = vadd.f32 %v316, %v324
    %v326 = vstv %s172
    %v327 = vmul.f32 %v156, %v326
    %v328 = vstv %s188
    %v329 = vadd.f32 %v327, %v328
    %v330 = vstv %s204
    %v331 = vmul.f32 %v330, %v329
    %v332 = vtanh.pop %v329
    %v333 = vmul.f32 %v331, %v332
    %v334 = vadd.f32 %v325, %v333
    %v335 = vstv %s173
    %v336 = vmul.f32 %v156, %v335
    %v337 = vstv %s189
    %v338 = vadd.f32 %v336, %v337
    %v339 = vstv %s205
    %v340 = vmul.f32 %v339, %v338
    %v341 = vtanh.pop %v338
    %v342 = vmul.f32 %v340, %v341
    %v343 = vadd.f32 %v334, %v342
    %v344 = vstv %s174
    %v345 = vmul.f32 %v156, %v344
    %v346 = vstv %s190
    %v347 = vadd.f32 %v345, %v346
    %v348 = vstv %s206
    %v349 = vmul.f32 %v348, %v347
    %v350 = vtanh.pop %v347
    %v351 = vmul.f32 %v349, %v350
    %v352 = vadd.f32 %v343, %v351
    %v353 = vstv %s207
    %v354 = vmul.f32 %v156, %v353
    %v355 = vstv %s208
    %v356 = vadd.f32 %v354, %v355
    %v357 = vadd.f32 %v356, %v352
    %v358 = vmul.f32 %v71, %v357
    %359 = vst [vmem:[%s6] sm:$0xff] %v358
    // Predicated region
    $region42: #{learnable_nlin_core.1} parent=1 // pred_check
      _
    $region43: #{learnable_nlin_core.1} parent=1 // pred_check_branch
      %361 = sbr.rel (0) target = $region45
    $region44: #{learnable_nlin_core.1} parent=1 // pred_region
      _
    $region45: #{learnable_nlin_core.1} parent=1 // pred_fallthru
      _
    // Predicated region
    $region46: #{learnable_nlin_core.1} parent=1 // pred_check
      _
    $region47: #{learnable_nlin_core.1} parent=1 // pred_check_branch
      %363 = sbr.rel (0) target = $region49
    $region48: #{learnable_nlin_core.1} parent=1 // pred_region
      _
    $region49: #{learnable_nlin_core.1} parent=1 // pred_fallthru
      _
    %364 = vsyncpa [#allocation3], 1
    %365 = vsyncpa [#allocation5], 1
    %366 = vsyncpa [#allocation8], 1

</llo_original>
